<compile_context>
chip_gen: v6e
topology: v6e:2x2x1
jax: 0.10.0
libtpu: 0.0.40
codegen_flags: <defaults>
</compile_context>

<pallas_src>
import jax
import jax.numpy as jnp
from jax.experimental import pallas as pl
from jax.experimental.pallas import tpu as pltpu


def attention_kernel(x_ref, w_ref, o_ref):
    # x_ref: (Bt, T, H) VMEM tile of batch elements
    # w_ref: (1, H)     lane-dense attention weight row
    # o_ref: (Bt, H)    output tile
    x = x_ref[...].astype(jnp.float32)          # (Bt, T, H), single cast, reused
    w = w_ref[...].astype(jnp.float32)          # (1, H)

    # attention_scores = Linear(H, 1, bias=False)(x).squeeze(-1)
    # -> VPU multiply + XLU lane reduction, no N=1 MXU matmul.
    scores = jnp.sum(x * w, axis=-1)            # (Bt, T)

    # softmax over the sequence dimension (dim=1 in PyTorch)
    m = jnp.max(scores, axis=1, keepdims=True)  # (Bt, 1)
    e = jnp.exp(scores - m)                     # (Bt, T)
    denom = jnp.sum(e, axis=1, keepdims=True)   # (Bt, 1)
    attn = e * pl.reciprocal(denom, approx=True)  # (Bt, T), divide on EUP slot

    # weighted_output = bmm(attn.unsqueeze(1), x).squeeze(1)
    # -> broadcast multiply + sublane reduction over T, no M=1 MXU matmul.
    out = jnp.sum(attn[:, :, None] * x, axis=1)   # (Bt, H)
    o_ref[...] = out.astype(o_ref.dtype)


def _choose_batch_block(B, T, H, itemsize):
    """Pick the batch block size Bt.

    Target ~4 MiB per input block so that double-buffered inputs plus in-kernel
    intermediates fit comfortably in scoped VMEM on every generation (incl.
    v7x's 64 MiB).  Round to a multiple of 8 for dense sublane-aligned output
    stores; tiny batches collapse to a single whole-array block.
    """
    target_bytes = 4 * 1024 * 1024
    per_elem = max(1, T * H * itemsize)
    bt = max(1, target_bytes // per_elem)
    if bt >= B:
        return B                      # one grid step, block == full array dims
    if bt >= 8:
        bt = (bt // 8) * 8            # dense 8-sublane output stores
    return int(bt)


def attention_layer(rnn_outputs, weight):
    """rnn_outputs: (B, T, H); weight: (1, H) (PyTorch Linear(H,1).weight) -> (B, H)."""
    B, T, H = rnn_outputs.shape
    assert weight.shape == (1, H)

    bt = _choose_batch_block(B, T, H, rnn_outputs.dtype.itemsize)
    grid = (pl.cdiv(B, bt),)

    return pl.pallas_call(
        attention_kernel,
        out_shape=jax.ShapeDtypeStruct((B, H), rnn_outputs.dtype),
        grid_spec=pltpu.PrefetchScalarGridSpec(
            num_scalar_prefetch=0,
            grid=grid,
            in_specs=[
                pl.BlockSpec((bt, T, H), lambda b: (b, 0, 0)),
                pl.BlockSpec((1, H), lambda b: (0, 0)),
            ],
            out_specs=pl.BlockSpec((bt, H), lambda b: (b, 0)),
        ),
        compiler_params=pltpu.CompilerParams(
            dimension_semantics=("parallel",),
            vmem_limit_bytes=48 * 1024 * 1024,
        ),
    )(rnn_outputs, weight)


def attention_layer_ref(rnn_outputs, weight):
    """Pure-JAX reference mirroring the PyTorch forward."""
    scores = jnp.einsum("bth,h->bt", rnn_outputs, weight[0])   # (B, T)
    attn = jax.nn.softmax(scores, axis=1)                      # (B, T)
    return jnp.einsum("bt,bth->bh", attn, rnn_outputs)         # (B, H)


if __name__ == "__main__":
    B, T, H = 2, 8, 32
    key = jax.random.PRNGKey(0)
    kx, kw = jax.random.split(key)

    rnn_outputs = jax.random.normal(kx, (B, T, H), dtype=jnp.float32)
    # PyTorch Linear(hidden_dim, 1, bias=False).weight has shape (1, H);
    # stored directly in that lane-dense layout.
    weight = jax.random.normal(kw, (1, H), dtype=jnp.float32) * (1.0 / jnp.sqrt(H))

    out = attention_layer(rnn_outputs, weight)
    out = jax.block_until_ready(out)

    ref = attention_layer_ref(rnn_outputs, weight)
    assert out.shape == (B, H)
    # approx reciprocal in the softmax denominator -> slightly looser tolerance
    assert jnp.allclose(out, ref, atol=2e-3, rtol=2e-3), float(
        jnp.max(jnp.abs(out - ref)))

    print("KERNEL_OK")
</pallas_src>

<mosaic_0001>
module attributes {stable_mosaic.version = 11 : i64} {
  func.func @attention_kernel(%arg0: i32, %arg1: memref<2x8x32xf32, #tpu.memory_space<vmem>>, %arg2: memref<1x32xf32, #tpu.memory_space<vmem>>, %arg3: memref<2x32xf32, #tpu.memory_space<vmem>>) attributes {dimension_semantics = [#tpu.dimension_semantics<parallel>], iteration_bounds = array<i64: 1>, scalar_prefetch = 0 : i64, scratch_operands = 0 : i64, tpu.core_type = #tpu.core_type<tc>, window_params = [{transform_indices = @transform_0, window_bounds = array<i64: 2, 8, 32>}, {pipeline_mode = #tpu.pipeline_mode<synchronous>, transform_indices = @transform_1, window_bounds = array<i64: 1, 32>}, {transform_indices = @transform_2, window_bounds = array<i64: 2, 32>}]} {
    %c0 = arith.constant 0 : index
    %c0_0 = arith.constant 0 : index
    %c0_1 = arith.constant 0 : index
    %0 = vector.load %arg1[%c0, %c0_0, %c0_1] : memref<2x8x32xf32, #tpu.memory_space<vmem>>, vector<2x8x32xf32>
    %c0_2 = arith.constant 0 : index
    %c0_3 = arith.constant 0 : index
    %1 = vector.load %arg2[%c0_2, %c0_3] : memref<1x32xf32, #tpu.memory_space<vmem>>, vector<1x32xf32>
    %2 = vector.shape_cast %1 : vector<1x32xf32> to vector<1x1x32xf32>
    %3 = vector.broadcast %2 : vector<1x1x32xf32> to vector<2x8x32xf32>
    %4 = arith.mulf %0, %3 : vector<2x8x32xf32>
    %cst = arith.constant dense<0.000000e+00> : vector<2x8xf32>
    %5 = vector.multi_reduction <add>, %4, %cst [2] : vector<2x8x32xf32> to vector<2x8xf32>
    %cst_4 = arith.constant dense<0xFF800000> : vector<2xf32>
    %6 = vector.multi_reduction <maximumf>, %5, %cst_4 [1] : vector<2x8xf32> to vector<2xf32>
    %7 = vector.shape_cast %6 : vector<2xf32> to vector<2x1xf32>
    %8 = vector.broadcast %7 : vector<2x1xf32> to vector<2x8xf32>
    %9 = arith.subf %5, %8 : vector<2x8xf32>
    %10 = math.exp %9 : vector<2x8xf32>
    %cst_5 = arith.constant dense<0.000000e+00> : vector<2xf32>
    %11 = vector.multi_reduction <add>, %10, %cst_5 [1] : vector<2x8xf32> to vector<2xf32>
    %12 = vector.shape_cast %11 : vector<2xf32> to vector<2x1xf32>
    %13 = tpu.reciprocal %12 {approx = true} : vector<2x1xf32> -> vector<2x1xf32>
    %14 = vector.broadcast %13 : vector<2x1xf32> to vector<2x8xf32>
    %15 = arith.mulf %10, %14 : vector<2x8xf32>
    %16 = vector.shape_cast %15 : vector<2x8xf32> to vector<2x8x1xf32>
    %17 = vector.broadcast %16 : vector<2x8x1xf32> to vector<2x8x32xf32>
    %18 = arith.mulf %17, %0 : vector<2x8x32xf32>
    %cst_6 = arith.constant dense<0.000000e+00> : vector<2x32xf32>
    %19 = vector.multi_reduction <add>, %18, %cst_6 [1] : vector<2x8x32xf32> to vector<2x32xf32>
    %c0_7 = arith.constant 0 : index
    %c0_8 = arith.constant 0 : index
    %20 = vector.load %arg3[%c0_7, %c0_8] : memref<2x32xf32, #tpu.memory_space<vmem>>, vector<2x32xf32>
    tpu.vector_store %arg3[%c0_7, %c0_8], %19 {strides = array<i32>} : memref<2x32xf32, #tpu.memory_space<vmem>>, vector<2x32xf32>,
    return
  }
  func.func @transform_0(%arg0: i32) -> (i32, i32, i32) {
    %c0_i32 = arith.constant 0 : i32
    %c0_i32_0 = arith.constant 0 : i32
    %c0_i32_1 = arith.constant 0 : i32
    return %arg0, %c0_i32, %c0_i32_0 : i32, i32, i32
  }
  func.func @transform_1(%arg0: i32) -> (i32, i32) {
    %c0_i32 = arith.constant 0 : i32
    %c0_i32_0 = arith.constant 0 : i32
    %c0_i32_1 = arith.constant 0 : i32
    return %c0_i32, %c0_i32_0 : i32, i32
  }
  func.func @transform_2(%arg0: i32) -> (i32, i32) {
    %c0_i32 = arith.constant 0 : i32
    %c0_i32_0 = arith.constant 0 : i32
    return %arg0, %c0_i32 : i32, i32
  }
}

</mosaic_0001>

<llo_original>
// kernel: tpu_custom_call.1
$region0: #{tpu_custom_call.1}
  #allocation0 [shape = 'u32[]', space=smem, size = 0x4, offset = 0x4, fixed_abs, tag = 'smem constant byte address 0x4 - core index']
  #allocation1 [shape = 'u32[144,128]{1,0:T(1,128)}', space=vmem, size = 0x12000, scoped, tag = 'internal scratch']
  %s0 = inlined_call_operand.hbm [shape: f32[2,8,32], index: 0, kind: input, shape index: {}]
  %s1 = inlined_call_operand.vmem [shape: f32[1,32], index: 1, kind: input, shape index: {}]
  %s2 = inlined_call_operand.hbm [shape: f32[2,32], index: 2, kind: output, shape index: {}]
  %s3 = sld [smem:[#allocation0]]
  $region22: #{tpu_custom_call.1} parent=0
    _
  %s5 = ssub.s32 1, %s3
  %s6 = scalar_select 0, %s5, %s3
  $region1: #{tpu_custom_call.1} parent=0
    #allocation2 [shape = 'u8[8192]{0}', space=vmem, size = 0x2000, scoped, tag = 'input window, operand 0, single buffered']
    #allocation3 [shape = 's32[1]{0}', space=sflag, size = 0x4, scoped, tag = 'scoped memory for tpu_custom_call.1']
    #allocation4 [shape = 's32[1]{0}', space=sflag, size = 0x4, scoped, tag = 'scoped memory for tpu_custom_call.1']
    #allocation5 [shape = 'u8[1024]{0}', space=vmem, size = 0x400, scoped, tag = 'output window, operand 0, single buffered']
    %7 = vsyncpa [#allocation3], 0
    %8 = vsyncpa [#allocation4], 0
    // Predicated region
    $region2: #{tpu_custom_call.1} parent=1 // pred_check
      _
    $region3: #{tpu_custom_call.1} parent=1 // pred_check_branch
      %10 = sbr.rel (0) target = $region5
    $region4: #{tpu_custom_call.1} parent=1 // pred_region
      %s12 = ssub.s32 256, 256
      %13 = vsyncadd [#allocation3], %s12
      %s14 = sshll.u32 [#allocation2], 4
      %s15 = int_to_ptr.vmem [resolvable:$true] %s14
      %20 = dma.hbm_to_vmem [thread:$0]  %s0, 256, %s15, [#allocation3], 128, 128, 8
    $region5: #{tpu_custom_call.1} parent=1 // pred_fallthru
      _
    // Predicated region
    $region6: #{tpu_custom_call.1} parent=1 // pred_check
      _
    $region7: #{tpu_custom_call.1} parent=1 // pred_check_branch
      %22 = sbr.rel (0) target = $region9
    $region8: #{tpu_custom_call.1} parent=1 // pred_region
      _
    $region9: #{tpu_custom_call.1} parent=1 // pred_fallthru
      _
    // Predicated region
    $region10: #{tpu_custom_call.1} parent=1 // pred_check
      _
    $region11: #{tpu_custom_call.1} parent=1 // pred_check_branch
      %24 = sbr.rel (0) target = $region13
    $region12: #{tpu_custom_call.1} parent=1 // pred_region
      %25 = dma.done [#allocation3], 256
    $region13: #{tpu_custom_call.1} parent=1 // pred_fallthru
      _
    %v26 = vld [vmem:[#allocation2] sm:$0xff]
    %v27 = vld [vmem:[#allocation2 + $0x8] sm:$0xff]
    %v28 = vld [vmem:[%s1] sm:$0x1]
    %v30 = vlaneseq
    %v31 = vshrl.u32 %v30, 7
    %v32 = vsub.s32 0, %v31
    %v33 = vrot.slane %v28, %v32
    %v35 = vmul.f32 %v26, %v33
    %v36 = vmul.f32 %v27, %v33
    %vm37 = vcmask 261120
    %v38 = vsel %vm37, %v35, 0.0
    %39 = vadd.xlane.f32.xlu0 %v38
    %v40 = vpop.xlane.xlu0 %39
    %v41 = vsel %vm37, %v36, 0.0
    %42 = vadd.xlane.f32.xlu0 %v41
    %v43 = vpop.xlane.xlu0 %42
    %v46 = vlaneseq
    %v47 = vand.u32 %v46, 127
    %v48 = vlaneseq
    %v49 = vshrl.u32 %v48, 7
    %v50 = vsub.s32 %v47, %v49
    %v51 = vrot.slane %v40, %v50
    %v52 = vlaneseq
    %v53 = vshrl.u32 %v52, 7
    %v54 = vsub.s32 %v47, %v53
    %v55 = vrot.slane %v43, %v54
    %vm56 = vcmask 1041409
    %v57 = vsel %vm56, %v55, %v51
    %vm59 = vcmask 58368
    %v60 = vsel %vm59, %v57, -inf
    %61 = vmax.xlane.f32.xlu0 %v60
    %v62 = vpop.xlane.xlu0 %61
    %v64 = vlaneseq
    %v65 = vshrl.u32 %v64, 7
    %v66 = vsub.s32 0, %v65
    %v67 = vrot.slane %v62, %v66
    %v68 = vlaneseq
    %v69 = vshrl.u32 %v68, 7
    %v70 = vsub.s32 1, %v69
    %v71 = vrot.slane %v62, %v70
    %v74 = vsub.f32 %v40, %v67
    %v75 = vsub.f32 %v43, %v71
    %v76 = vmul.f32 %v74, 1.442695
    %v77 = vpow.pop %v76
    %v78 = vmul.f32 %v75, 1.442695
    %v79 = vpow.pop %v78
    %82 = vset.pattern.permute.xlu0 0
    %83 = vperm.xlu0 %82, %v77
    %v84 = vpop.permute.xlu0 %83
    %85 = vset.pattern.permute.xlu0 0
    %86 = vperm.xlu0 %85, %v79
    %v87 = vpop.permute.xlu0 %86
    %v88 = vlaneseq
    %v89 = vshrl.u32 %v88, 7
    %v90 = vsub.s32 %v47, %v89
    %v91 = vrot.slane %v84, %v90
    %v92 = vlaneseq
    %v93 = vshrl.u32 %v92, 7
    %v94 = vsub.s32 %v47, %v93
    %v95 = vrot.slane %v87, %v94
    %v96 = vsel %vm56, %v95, %v91
    %v98 = vsel %vm59, %v96, 0.0
    %99 = vadd.xlane.f32.xlu0 %v98
    %v100 = vpop.xlane.xlu0 %99
    %v101 = vrcp.pop %v100
    %v103 = vlaneseq
    %v104 = vshrl.u32 %v103, 7
    %v105 = vsub.s32 0, %v104
    %v106 = vrot.slane %v101, %v105
    %v107 = vlaneseq
    %v108 = vshrl.u32 %v107, 7
    %v109 = vsub.s32 1, %v108
    %v110 = vrot.slane %v101, %v109
    %v113 = vmul.f32 %v77, %v106
    %v114 = vmul.f32 %v79, %v110
    %116 = vset.pattern.permute.xlu0 0
    %117 = vperm.xlu0 %116, %v113
    %v118 = vpop.permute.xlu0 %117
    %121 = vset.pattern.permute.xlu0 0
    %122 = vperm.xlu0 %121, %v114
    %v123 = vpop.permute.xlu0 %122
    %v125 = vmul.f32 %v118, %v26
    %v126 = vmul.f32 %v123, %v27
    %v127 = vsel %vm37, %v125, 0.0
    %v128 = vrot.slane %v127, 4
    %v129 = vadd.f32 %v127, %v128
    %v130 = vrot.slane %v129, 2
    %v131 = vadd.f32 %v129, %v130
    %v132 = vrot.slane %v131, 1
    %v133 = vadd.f32 %v131, %v132
    %v134 = vsel %vm37, %v126, 0.0
    %v135 = vrot.slane %v134, 4
    %v136 = vadd.f32 %v134, %v135
    %v137 = vrot.slane %v136, 2
    %v138 = vadd.f32 %v136, %v137
    %v139 = vrot.slane %v138, 1
    %v140 = vadd.f32 %v138, %v139
    %v143 = vsel %vm56, %v140, %v133
    %vm145 = vcmask 254976
    %146 = vst.msk [vmem:[#allocation5] sm:$0x3] %vm145, %v143
    // Predicated region
    $region14: #{tpu_custom_call.1} parent=1 // pred_check
      _
    $region15: #{tpu_custom_call.1} parent=1 // pred_check_branch
      %148 = sbr.rel (0) target = $region17
    $region16: #{tpu_custom_call.1} parent=1 // pred_region
      %s150 = ssub.s32 32, 32
      %151 = vsyncadd [#allocation4], %s150
      %s153 = sshll.u32 [#allocation5], 4
      %s154 = int_to_ptr.vmem [resolvable:$true] %s153
      %156 = dma.vmem_to_hbm [thread:$0]  %s154, 32, %s2, [#allocation4]
    $region17: #{tpu_custom_call.1} parent=1 // pred_fallthru
      _
    // Predicated region
    $region18: #{tpu_custom_call.1} parent=1 // pred_check
      _
    $region19: #{tpu_custom_call.1} parent=1 // pred_check_branch
      %158 = sbr.rel (0) target = $region21
    $region20: #{tpu_custom_call.1} parent=1 // pred_region
      %159 = dma.done [#allocation4], 32
    $region21: #{tpu_custom_call.1} parent=1 // pred_fallthru
      _
    %160 = vsyncpa [#allocation3], 1
    %161 = vsyncpa [#allocation4], 1

</llo_original>
